<compile_context>
chip_gen: v5e
topology: v5e:2x2
jax: 0.10.0
libtpu: 0.0.40
codegen_flags: <defaults>
</compile_context>

<pallas_src>
import math

import jax
import jax.numpy as jnp
from jax import lax
from jax.experimental import pallas as pl
from jax.experimental.pallas import tpu as pltpu


KERNEL_SIZE = (5, 5)        # odd & positive, as the module requires
SIGMA_RANGE = (0.1, 2.0)    # module default; sigma drawn deterministically


def _gaussian_kernel1d(ksize: int, sigma) -> jnp.ndarray:
    # mirrors torchvision _get_gaussian_kernel1d
    half = (ksize - 1) * 0.5
    x = jnp.linspace(-half, half, ksize, dtype=jnp.float32)
    pdf = jnp.exp(-0.5 * (x / sigma) ** 2)
    return pdf / jnp.sum(pdf)


def _gaussian_kernel2d(kernel_size, sigma) -> jnp.ndarray:
    ky = _gaussian_kernel1d(kernel_size[0], sigma)
    kx = _gaussian_kernel1d(kernel_size[1], sigma)
    return ky[:, None] * kx[None, :]            # (kh, kw), sums to 1


def _make_blur_kernel(kh: int, kw: int, PB: int, H: int, W: int):
    ph, pw = kh // 2, kw // 2
    Hp, Wp = H + 2 * ph, W + 2 * pw

    def blur_kernel(wy_ref, wx_ref, x_ref, o_ref, xpad_ref, tmp_ref):
        # wy_ref: (kh,) f32 SMEM     wx_ref: (kw,) f32 SMEM
        # x_ref : (PB, H, W)  input block in VMEM
        # o_ref : (PB, H, W)  output block in VMEM
        # xpad_ref: (PB, Hp, Wp) f32 VMEM scratch (reflect-padded plane)
        # tmp_ref : (PB, Hp, W)  f32 VMEM scratch (after horizontal pass)

        # ---- build reflect padding in VMEM (no host-side jnp.pad HBM pass) ----
        xpad_ref[:, ph:ph + H, pw:pw + W] = x_ref[...].astype(jnp.float32)
        for j in range(pw):                      # reflect left / right columns
            xpad_ref[:, ph:ph + H, pw - 1 - j:pw - j] = (
                x_ref[:, :, 1 + j:2 + j].astype(jnp.float32))
            xpad_ref[:, ph:ph + H, pw + W + j:pw + W + j + 1] = (
                x_ref[:, :, W - 2 - j:W - 1 - j].astype(jnp.float32))
        for i in range(ph):                      # reflect top / bottom rows
            xpad_ref[:, ph - 1 - i:ph - i, :] = (
                xpad_ref[:, ph + 1 + i:ph + 2 + i, :])
            xpad_ref[:, ph + H + i:ph + H + i + 1, :] = (
                xpad_ref[:, ph + H - 2 - i:ph + H - 1 - i, :])

        # ---- pass 1: horizontal blur (kw taps), slice the ref per tap ----
        acc = wx_ref[0] * xpad_ref[:, :, 0:W]
        for j in range(1, kw):                   # static unroll
            acc = acc + wx_ref[j] * xpad_ref[:, :, j:j + W]
        tmp_ref[...] = acc

        # ---- pass 2: vertical blur (kh taps) ----
        out = wy_ref[0] * tmp_ref[:, 0:H, :]
        for i in range(1, kh):                   # static unroll
            out = out + wy_ref[i] * tmp_ref[:, i:i + H, :]
        o_ref[...] = out.astype(o_ref.dtype)

    return blur_kernel


def _pick_plane_block(nc: int, h: int, w: int, kh: int, kw: int) -> int:
    """Choose how many (n, c) planes to process per grid step."""
    ph, pw = kh // 2, kw // 2
    # f32 scratch bytes per plane (padded plane + horizontal intermediate)
    per_plane = 4 * ((h + 2 * ph) * (w + 2 * pw) + (h + 2 * ph) * w)
    budget = 4 * 1024 * 1024                     # keep blocks comfortably in VMEM
    pb = max(1, min(nc, budget // max(per_plane, 1)))
    while nc % pb:                               # pb must divide nc
        pb -= 1
    if pb == nc and nc > 1:                      # keep >=2 parallel grid steps
        for d in range(nc // 2, 0, -1):
            if nc % d == 0:
                pb = d
                break
    return pb


def gaussian_blur_pallas(img: jnp.ndarray, sigma, kernel_size=KERNEL_SIZE):
    """img: [..., C, H, W] float array. Returns Gaussian-blurred array."""
    *lead, H, W = img.shape
    kh, kw = kernel_size
    ph, pw = kh // 2, kw // 2
    if H < ph + 1 or W < pw + 1:
        raise ValueError("spatial dims too small for reflect padding")

    nc = int(math.prod(lead)) if lead else 1
    x = img.reshape(nc, H, W)

    wy = _gaussian_kernel1d(kh, sigma).astype(jnp.float32)
    wx = _gaussian_kernel1d(kw, sigma).astype(jnp.float32)

    PB = _pick_plane_block(nc, H, W, kh, kw)
    Hp, Wp = H + 2 * ph, W + 2 * pw
    grid = (nc // PB,)

    out = pl.pallas_call(
        _make_blur_kernel(kh, kw, PB, H, W),
        out_shape=jax.ShapeDtypeStruct((nc, H, W), img.dtype),
        grid=grid,
        in_specs=[
            # 1D Gaussian taps -> SMEM scalars
            pl.BlockSpec(memory_space=pltpu.MemorySpace.SMEM),
            pl.BlockSpec(memory_space=pltpu.MemorySpace.SMEM),
            # several unpadded planes per grid step
            pl.BlockSpec((PB, H, W), lambda p: (p, 0, 0)),
        ],
        out_specs=pl.BlockSpec((PB, H, W), lambda p: (p, 0, 0)),
        scratch_shapes=[
            pltpu.VMEM((PB, Hp, Wp), jnp.float32),   # reflect-padded plane
            pltpu.VMEM((PB, Hp, W), jnp.float32),    # horizontal-pass result
        ],
        compiler_params=pltpu.CompilerParams(
            dimension_semantics=("parallel",),
            vmem_limit_bytes=64 * 1024 * 1024,
        ),
    )(wy, wx, x)
    return out.reshape(img.shape)


def gaussian_blur_reference(img: jnp.ndarray, sigma, kernel_size=KERNEL_SIZE):
    """Plain-JAX reference: depthwise conv2d with reflect padding."""
    N, C, H, W = img.shape
    kh, kw = kernel_size
    ph, pw = kh // 2, kw // 2
    k2d = _gaussian_kernel2d(kernel_size, sigma).astype(jnp.float32)
    xp = jnp.pad(img, ((0, 0), (0, 0), (ph, ph), (pw, pw)), mode="reflect")
    w = jnp.broadcast_to(k2d, (C, 1, kh, kw))           # (O=C, I/groups=1, kh, kw)
    return lax.conv_general_dilated(
        xp.astype(jnp.float32), w, window_strides=(1, 1), padding="VALID",
        dimension_numbers=("NCHW", "OIHW", "NCHW"),
        feature_group_count=C).astype(img.dtype)


if __name__ == "__main__":
    key = jax.random.PRNGKey(0)
    k_img, k_sigma = jax.random.split(key)

    # deterministic stand-in for torch.empty(1).uniform_(sigma_min, sigma_max)
    sigma = jax.random.uniform(
        k_sigma, (), jnp.float32, SIGMA_RANGE[0], SIGMA_RANGE[1])

    x = jax.random.normal(k_img, (2, 4, 16, 16), dtype=jnp.float32)

    out = gaussian_blur_pallas(x, sigma)
    out = jax.block_until_ready(out)

    ref = jax.block_until_ready(gaussian_blur_reference(x, sigma))
    assert out.shape == x.shape and out.dtype == x.dtype
    assert jnp.allclose(out, ref, atol=1e-5, rtol=1e-5), "mismatch vs reference"

    print("KERNEL_OK")
</pallas_src>

<mosaic_0001>
module attributes {stable_mosaic.version = 11 : i64} {
  func.func @blur_kernel(%arg0: i32, %arg1: memref<5xf32, #tpu.memory_space<smem>>, %arg2: memref<5xf32, #tpu.memory_space<smem>>, %arg3: memref<4x16x16xf32, #tpu.memory_space<vmem>>, %arg4: memref<4x16x16xf32, #tpu.memory_space<vmem>>, %arg5: memref<4x20x20xf32, #tpu.memory_space<vmem>>, %arg6: memref<4x20x16xf32, #tpu.memory_space<vmem>>) attributes {dimension_semantics = [#tpu.dimension_semantics<parallel>], iteration_bounds = array<i64: 2>, scalar_prefetch = 0 : i64, scratch_operands = 2 : i64, tpu.core_type = #tpu.core_type<tc>, window_params = [{transform_indices = @transform_0, window_bounds = array<i64: 5>}, {transform_indices = @transform_1, window_bounds = array<i64: 5>}, {transform_indices = @transform_2, window_bounds = array<i64: 4, 16, 16>}, {transform_indices = @transform_3, window_bounds = array<i64: 4, 16, 16>}]} {
    %c0 = arith.constant 0 : index
    %c0_0 = arith.constant 0 : index
    %c0_1 = arith.constant 0 : index
    %0 = vector.load %arg3[%c0, %c0_0, %c0_1] : memref<4x16x16xf32, #tpu.memory_space<vmem>>, vector<4x16x16xf32>
    %c0_2 = arith.constant 0 : index
    %c2 = arith.constant 2 : index
    %c2_3 = arith.constant 2 : index
    %1 = vector.load %arg5[%c0_2, %c2, %c2_3] : memref<4x20x20xf32, #tpu.memory_space<vmem>>, vector<4x16x16xf32>
    tpu.vector_store %arg5[%c0_2, %c2, %c2_3], %0 {strides = array<i32>} : memref<4x20x20xf32, #tpu.memory_space<vmem>>, vector<4x16x16xf32>,
    %c0_4 = arith.constant 0 : index
    %c0_5 = arith.constant 0 : index
    %c1 = arith.constant 1 : index
    %2 = vector.load %arg3[%c0_4, %c0_5, %c1] : memref<4x16x16xf32, #tpu.memory_space<vmem>>, vector<4x16x1xf32>
    %c0_6 = arith.constant 0 : index
    %c2_7 = arith.constant 2 : index
    %c1_8 = arith.constant 1 : index
    %3 = vector.load %arg5[%c0_6, %c2_7, %c1_8] : memref<4x20x20xf32, #tpu.memory_space<vmem>>, vector<4x16x1xf32>
    tpu.vector_store %arg5[%c0_6, %c2_7, %c1_8], %2 {strides = array<i32>} : memref<4x20x20xf32, #tpu.memory_space<vmem>>, vector<4x16x1xf32>,
    %c0_9 = arith.constant 0 : index
    %c0_10 = arith.constant 0 : index
    %c14 = arith.constant 14 : index
    %4 = vector.load %arg3[%c0_9, %c0_10, %c14] : memref<4x16x16xf32, #tpu.memory_space<vmem>>, vector<4x16x1xf32>
    %c0_11 = arith.constant 0 : index
    %c2_12 = arith.constant 2 : index
    %c18 = arith.constant 18 : index
    %5 = vector.load %arg5[%c0_11, %c2_12, %c18] : memref<4x20x20xf32, #tpu.memory_space<vmem>>, vector<4x16x1xf32>
    tpu.vector_store %arg5[%c0_11, %c2_12, %c18], %4 {strides = array<i32>} : memref<4x20x20xf32, #tpu.memory_space<vmem>>, vector<4x16x1xf32>,
    %c0_13 = arith.constant 0 : index
    %c0_14 = arith.constant 0 : index
    %c2_15 = arith.constant 2 : index
    %6 = vector.load %arg3[%c0_13, %c0_14, %c2_15] : memref<4x16x16xf32, #tpu.memory_space<vmem>>, vector<4x16x1xf32>
    %c0_16 = arith.constant 0 : index
    %c2_17 = arith.constant 2 : index
    %c0_18 = arith.constant 0 : index
    %7 = vector.load %arg5[%c0_16, %c2_17, %c0_18] : memref<4x20x20xf32, #tpu.memory_space<vmem>>, vector<4x16x1xf32>
    tpu.vector_store %arg5[%c0_16, %c2_17, %c0_18], %6 {strides = array<i32>} : memref<4x20x20xf32, #tpu.memory_space<vmem>>, vector<4x16x1xf32>,
    %c0_19 = arith.constant 0 : index
    %c0_20 = arith.constant 0 : index
    %c13 = arith.constant 13 : index
    %8 = vector.load %arg3[%c0_19, %c0_20, %c13] : memref<4x16x16xf32, #tpu.memory_space<vmem>>, vector<4x16x1xf32>
    %c0_21 = arith.constant 0 : index
    %c2_22 = arith.constant 2 : index
    %c19 = arith.constant 19 : index
    %9 = vector.load %arg5[%c0_21, %c2_22, %c19] : memref<4x20x20xf32, #tpu.memory_space<vmem>>, vector<4x16x1xf32>
    tpu.vector_store %arg5[%c0_21, %c2_22, %c19], %8 {strides = array<i32>} : memref<4x20x20xf32, #tpu.memory_space<vmem>>, vector<4x16x1xf32>,
    %c0_23 = arith.constant 0 : index
    %c3 = arith.constant 3 : index
    %c0_24 = arith.constant 0 : index
    %10 = vector.load %arg5[%c0_23, %c3, %c0_24] : memref<4x20x20xf32, #tpu.memory_space<vmem>>, vector<4x1x20xf32>
    %c0_25 = arith.constant 0 : index
    %c1_26 = arith.constant 1 : index
    %c0_27 = arith.constant 0 : index
    %11 = vector.load %arg5[%c0_25, %c1_26, %c0_27] : memref<4x20x20xf32, #tpu.memory_space<vmem>>, vector<4x1x20xf32>
    tpu.vector_store %arg5[%c0_25, %c1_26, %c0_27], %10 {strides = array<i32>} : memref<4x20x20xf32, #tpu.memory_space<vmem>>, vector<4x1x20xf32>,
    %c0_28 = arith.constant 0 : index
    %c16 = arith.constant 16 : index
    %c0_29 = arith.constant 0 : index
    %12 = vector.load %arg5[%c0_28, %c16, %c0_29] : memref<4x20x20xf32, #tpu.memory_space<vmem>>, vector<4x1x20xf32>
    %c0_30 = arith.constant 0 : index
    %c18_31 = arith.constant 18 : index
    %c0_32 = arith.constant 0 : index
    %13 = vector.load %arg5[%c0_30, %c18_31, %c0_32] : memref<4x20x20xf32, #tpu.memory_space<vmem>>, vector<4x1x20xf32>
    tpu.vector_store %arg5[%c0_30, %c18_31, %c0_32], %12 {strides = array<i32>} : memref<4x20x20xf32, #tpu.memory_space<vmem>>, vector<4x1x20xf32>,
    %c0_33 = arith.constant 0 : index
    %c4 = arith.constant 4 : index
    %c0_34 = arith.constant 0 : index
    %14 = vector.load %arg5[%c0_33, %c4, %c0_34] : memref<4x20x20xf32, #tpu.memory_space<vmem>>, vector<4x1x20xf32>
    %c0_35 = arith.constant 0 : index
    %c0_36 = arith.constant 0 : index
    %c0_37 = arith.constant 0 : index
    %15 = vector.load %arg5[%c0_35, %c0_36, %c0_37] : memref<4x20x20xf32, #tpu.memory_space<vmem>>, vector<4x1x20xf32>
    tpu.vector_store %arg5[%c0_35, %c0_36, %c0_37], %14 {strides = array<i32>} : memref<4x20x20xf32, #tpu.memory_space<vmem>>, vector<4x1x20xf32>,
    %c0_38 = arith.constant 0 : index
    %c15 = arith.constant 15 : index
    %c0_39 = arith.constant 0 : index
    %16 = vector.load %arg5[%c0_38, %c15, %c0_39] : memref<4x20x20xf32, #tpu.memory_space<vmem>>, vector<4x1x20xf32>
    %c0_40 = arith.constant 0 : index
    %c19_41 = arith.constant 19 : index
    %c0_42 = arith.constant 0 : index
    %17 = vector.load %arg5[%c0_40, %c19_41, %c0_42] : memref<4x20x20xf32, #tpu.memory_space<vmem>>, vector<4x1x20xf32>
    tpu.vector_store %arg5[%c0_40, %c19_41, %c0_42], %16 {strides = array<i32>} : memref<4x20x20xf32, #tpu.memory_space<vmem>>, vector<4x1x20xf32>,
    %c0_43 = arith.constant 0 : index
    %18 = memref.load %arg2[%c0_43] : memref<5xf32, #tpu.memory_space<smem>>
    %c0_44 = arith.constant 0 : index
    %c0_45 = arith.constant 0 : index
    %c0_46 = arith.constant 0 : index
    %19 = vector.load %arg5[%c0_44, %c0_45, %c0_46] : memref<4x20x20xf32, #tpu.memory_space<vmem>>, vector<4x20x16xf32>
    %20 = vector.broadcast %18 : f32 to vector<4x20x16xf32>
    %21 = arith.mulf %20, %19 : vector<4x20x16xf32>
    %c1_47 = arith.constant 1 : index
    %22 = memref.load %arg2[%c1_47] : memref<5xf32, #tpu.memory_space<smem>>
    %c0_48 = arith.constant 0 : index
    %c0_49 = arith.constant 0 : index
    %c1_50 = arith.constant 1 : index
    %23 = vector.load %arg5[%c0_48, %c0_49, %c1_50] : memref<4x20x20xf32, #tpu.memory_space<vmem>>, vector<4x20x16xf32>
    %24 = vector.broadcast %22 : f32 to vector<4x20x16xf32>
    %25 = arith.mulf %24, %23 : vector<4x20x16xf32>
    %26 = arith.addf %21, %25 : vector<4x20x16xf32>
    %c2_51 = arith.constant 2 : index
    %27 = memref.load %arg2[%c2_51] : memref<5xf32, #tpu.memory_space<smem>>
    %c0_52 = arith.constant 0 : index
    %c0_53 = arith.constant 0 : index
    %c2_54 = arith.constant 2 : index
    %28 = vector.load %arg5[%c0_52, %c0_53, %c2_54] : memref<4x20x20xf32, #tpu.memory_space<vmem>>, vector<4x20x16xf32>
    %29 = vector.broadcast %27 : f32 to vector<4x20x16xf32>
    %30 = arith.mulf %29, %28 : vector<4x20x16xf32>
    %31 = arith.addf %26, %30 : vector<4x20x16xf32>
    %c3_55 = arith.constant 3 : index
    %32 = memref.load %arg2[%c3_55] : memref<5xf32, #tpu.memory_space<smem>>
    %c0_56 = arith.constant 0 : index
    %c0_57 = arith.constant 0 : index
    %c3_58 = arith.constant 3 : index
    %33 = vector.load %arg5[%c0_56, %c0_57, %c3_58] : memref<4x20x20xf32, #tpu.memory_space<vmem>>, vector<4x20x16xf32>
    %34 = vector.broadcast %32 : f32 to vector<4x20x16xf32>
    %35 = arith.mulf %34, %33 : vector<4x20x16xf32>
    %36 = arith.addf %31, %35 : vector<4x20x16xf32>
    %c4_59 = arith.constant 4 : index
    %37 = memref.load %arg2[%c4_59] : memref<5xf32, #tpu.memory_space<smem>>
    %c0_60 = arith.constant 0 : index
    %c0_61 = arith.constant 0 : index
    %c4_62 = arith.constant 4 : index
    %38 = vector.load %arg5[%c0_60, %c0_61, %c4_62] : memref<4x20x20xf32, #tpu.memory_space<vmem>>, vector<4x20x16xf32>
    %39 = vector.broadcast %37 : f32 to vector<4x20x16xf32>
    %40 = arith.mulf %39, %38 : vector<4x20x16xf32>
    %41 = arith.addf %36, %40 : vector<4x20x16xf32>
    %c0_63 = arith.constant 0 : index
    %c0_64 = arith.constant 0 : index
    %c0_65 = arith.constant 0 : index
    %42 = vector.load %arg6[%c0_63, %c0_64, %c0_65] : memref<4x20x16xf32, #tpu.memory_space<vmem>>, vector<4x20x16xf32>
    tpu.vector_store %arg6[%c0_63, %c0_64, %c0_65], %41 {strides = array<i32>} : memref<4x20x16xf32, #tpu.memory_space<vmem>>, vector<4x20x16xf32>,
    %c0_66 = arith.constant 0 : index
    %43 = memref.load %arg1[%c0_66] : memref<5xf32, #tpu.memory_space<smem>>
    %c0_67 = arith.constant 0 : index
    %c0_68 = arith.constant 0 : index
    %c0_69 = arith.constant 0 : index
    %44 = vector.load %arg6[%c0_67, %c0_68, %c0_69] : memref<4x20x16xf32, #tpu.memory_space<vmem>>, vector<4x16x16xf32>
    %45 = vector.broadcast %43 : f32 to vector<4x16x16xf32>
    %46 = arith.mulf %45, %44 : vector<4x16x16xf32>
    %c1_70 = arith.constant 1 : index
    %47 = memref.load %arg1[%c1_70] : memref<5xf32, #tpu.memory_space<smem>>
    %c0_71 = arith.constant 0 : index
    %c1_72 = arith.constant 1 : index
    %c0_73 = arith.constant 0 : index
    %48 = vector.load %arg6[%c0_71, %c1_72, %c0_73] : memref<4x20x16xf32, #tpu.memory_space<vmem>>, vector<4x16x16xf32>
    %49 = vector.broadcast %47 : f32 to vector<4x16x16xf32>
    %50 = arith.mulf %49, %48 : vector<4x16x16xf32>
    %51 = arith.addf %46, %50 : vector<4x16x16xf32>
    %c2_74 = arith.constant 2 : index
    %52 = memref.load %arg1[%c2_74] : memref<5xf32, #tpu.memory_space<smem>>
    %c0_75 = arith.constant 0 : index
    %c2_76 = arith.constant 2 : index
    %c0_77 = arith.constant 0 : index
    %53 = vector.load %arg6[%c0_75, %c2_76, %c0_77] : memref<4x20x16xf32, #tpu.memory_space<vmem>>, vector<4x16x16xf32>
    %54 = vector.broadcast %52 : f32 to vector<4x16x16xf32>
    %55 = arith.mulf %54, %53 : vector<4x16x16xf32>
    %56 = arith.addf %51, %55 : vector<4x16x16xf32>
    %c3_78 = arith.constant 3 : index
    %57 = memref.load %arg1[%c3_78] : memref<5xf32, #tpu.memory_space<smem>>
    %c0_79 = arith.constant 0 : index
    %c3_80 = arith.constant 3 : index
    %c0_81 = arith.constant 0 : index
    %58 = vector.load %arg6[%c0_79, %c3_80, %c0_81] : memref<4x20x16xf32, #tpu.memory_space<vmem>>, vector<4x16x16xf32>
    %59 = vector.broadcast %57 : f32 to vector<4x16x16xf32>
    %60 = arith.mulf %59, %58 : vector<4x16x16xf32>
    %61 = arith.addf %56, %60 : vector<4x16x16xf32>
    %c4_82 = arith.constant 4 : index
    %62 = memref.load %arg1[%c4_82] : memref<5xf32, #tpu.memory_space<smem>>
    %c0_83 = arith.constant 0 : index
    %c4_84 = arith.constant 4 : index
    %c0_85 = arith.constant 0 : index
    %63 = vector.load %arg6[%c0_83, %c4_84, %c0_85] : memref<4x20x16xf32, #tpu.memory_space<vmem>>, vector<4x16x16xf32>
    %64 = vector.broadcast %62 : f32 to vector<4x16x16xf32>
    %65 = arith.mulf %64, %63 : vector<4x16x16xf32>
    %66 = arith.addf %61, %65 : vector<4x16x16xf32>
    %c0_86 = arith.constant 0 : index
    %c0_87 = arith.constant 0 : index
    %c0_88 = arith.constant 0 : index
    %67 = vector.load %arg4[%c0_86, %c0_87, %c0_88] : memref<4x16x16xf32, #tpu.memory_space<vmem>>, vector<4x16x16xf32>
    tpu.vector_store %arg4[%c0_86, %c0_87, %c0_88], %66 {strides = array<i32>} : memref<4x16x16xf32, #tpu.memory_space<vmem>>, vector<4x16x16xf32>,
    return
  }
  func.func @transform_0(%arg0: i32) -> i32 {
    %c0_i32 = arith.constant 0 : i32
    %c0_i32_0 = arith.constant 0 : i32
    return %c0_i32 : i32
  }
  func.func @transform_1(%arg0: i32) -> i32 {
    %c0_i32 = arith.constant 0 : i32
    %c0_i32_0 = arith.constant 0 : i32
    return %c0_i32 : i32
  }
  func.func @transform_2(%arg0: i32) -> (i32, i32, i32) {
    %c0_i32 = arith.constant 0 : i32
    %c0_i32_0 = arith.constant 0 : i32
    %c0_i32_1 = arith.constant 0 : i32
    return %arg0, %c0_i32, %c0_i32_0 : i32, i32, i32
  }
  func.func @transform_3(%arg0: i32) -> (i32, i32, i32) {
    %c0_i32 = arith.constant 0 : i32
    %c0_i32_0 = arith.constant 0 : i32
    %c0_i32_1 = arith.constant 0 : i32
    return %arg0, %c0_i32, %c0_i32_0 : i32, i32, i32
  }
}

</mosaic_0001>

<llo_original>
// kernel: tpu_custom_call.1
$region0: #{tpu_custom_call.1}
  #allocation0 [shape = 'u32[]', space=smem, size = 0x4, offset = 0x4, fixed_abs, tag = 'smem constant byte address 0x4 - core index']
  #allocation1 [shape = 'u32[72,128]{1,0:T(1,128)}', space=vmem, size = 0x9000, scoped, tag = 'internal scratch']
  #allocation2 [shape = 'f32[4,20,20]{2,1,0:T(8,128)}', space=vmem, size = 0xc000, scoped, tag = 'scratch operand']
  #allocation3 [shape = 'f32[4,20,16]{2,1,0:T(8,128)}', space=vmem, size = 0xc000, scoped, tag = 'scratch operand']
  %s0 = inlined_call_operand.hbm [shape: f32[5], index: 0, kind: input, shape index: {}]
  %s1 = inlined_call_operand.hbm [shape: f32[5], index: 1, kind: input, shape index: {}]
  %s2 = inlined_call_operand.hbm [shape: f32[8,16,16], index: 2, kind: input, shape index: {}]
  %s3 = inlined_call_operand.hbm [shape: f32[8,16,16], index: 3, kind: output, shape index: {}]
  %s4 = sld [smem:[#allocation0]]
  $region57: #{tpu_custom_call.1} parent=0
    _
  %s6 = ssub.s32 1, %s4
  %s7 = scalar_select 0, %s6, %s4
  $region1: #{tpu_custom_call.1} parent=0
    #allocation4 [shape = 'u8[512]{0}', space=smem, size = 0x200, scoped, tag = 'input window, operand 0, single buffered']
    #allocation5 [shape = 's32[2]{0}', space=sflag, size = 0x8, scoped, tag = 'scoped memory for tpu_custom_call.1']
    #allocation6 [shape = 's32[2]{0}', space=sflag, size = 0x8, scoped, tag = 'scoped memory for tpu_custom_call.1']
    #allocation7 [shape = 's32[2]{0}', space=sflag, size = 0x8, scoped, tag = 'scoped memory for tpu_custom_call.1']
    #allocation8 [shape = 'u8[512]{0}', space=smem, size = 0x200, scoped, tag = 'input window, operand 1, single buffered']
    #allocation9 [shape = 's32[1]{0}', space=sflag, size = 0x4, scoped, tag = 'scoped memory for tpu_custom_call.1']
    #allocation10 [shape = 'u8[65536]{0}', space=vmem, size = 0x10000, scoped, tag = 'input window, operand 2']
    #allocation11 [shape = 'u8[65536]{0}', space=vmem, size = 0x10000, scoped, tag = 'output window, operand 0']
    %8 = vsyncpa [#allocation7], 0
    %9 = vsyncpa [#allocation9], 0
    %10 = vsyncpa [#allocation5], 0
    %s11 = scalar_lea.sflag [#allocation5], 1
    %12 = vsyncpa %s11, 0
    %13 = vsyncpa [#allocation6], 0
    %s14 = scalar_lea.sflag [#allocation6], 1
    %15 = vsyncpa %s14, 0
    loop: start=0, step=1, limit=4
    $region2: #{tpu_custom_call.1} parent=1 // loop_pre_header
      _
    $region3: #{tpu_custom_call.1} parent=1 // loop_header
      %s17 = sphi 0, %s21
      %p18 = scmp.ge.s32.totalorder %s17, 4
      %s25 = sphi 0, %s25
      %s27 = sphi 0, %s25
      %s28 = sphi 0, %s27
      %s42 = sphi 0, %s28
      %s46 = sphi 0, %s46
      %s48 = sphi 0, %s46
      %s49 = sphi 0, %s48
      %s63 = sphi 0, %s49
      %s69 = sphi 0, %s71
      %s72 = sphi 0, %s69
      %s73 = sphi 0, %s72
      %s89 = sphi 0, %s73
      %s95 = sphi 0, %s97
      %s98 = sphi 0, %s95
      %s99 = sphi 0, %s98
      %s115 = sphi 0, %s99
    $region4: #{tpu_custom_call.1} parent=1 // loop_header_branch
      %20 = sbr.rel (%p18) target = $region8
    $region5: #{tpu_custom_call.1} parent=1 // loop_body
      %s22 = ssub.s32 %s17, 1
      %s23 = ssub.s32 %s17, 2
      %s24 = sadd.s32 %s17, 1
      %s26 = sadd.s32 %s25, 1
      %p29 = scmp.eq.s32.totalorder %s17, 1
      %p30 = scmp.ne.s32.totalorder %s25, %s27
      %p31 = scmp.eq.s32.totalorder %s17, 0
      %p32 = por %p30, %p31
      %p33 = scmp.ne.s32.totalorder %s25, %s27
      %p34 = scmp.eq.s32.totalorder %s22, 1
      %p35 = por %p33, %p34
      %p36 = scmp.ne.s32.totalorder %s27, %s28
      %p37 = scmp.eq.s32.totalorder %s22, 0
      %p38 = por %p36, %p37
      %p39 = scmp.ne.s32.totalorder %s27, %s28
      %p40 = scmp.eq.s32.totalorder %s23, 1
      %p41 = por %p39, %p40
      %p43 = scmp.ne.s32.totalorder %s28, %s42
      %p44 = scmp.eq.s32.totalorder %s23, 0
      %p45 = por %p43, %p44
      %s47 = sadd.s32 %s46, 1
      %p50 = scmp.eq.s32.totalorder %s17, 1
      %p51 = scmp.ne.s32.totalorder %s46, %s48
      %p52 = scmp.eq.s32.totalorder %s17, 0
      %p53 = por %p51, %p52
      %p54 = scmp.ne.s32.totalorder %s46, %s48
      %p55 = scmp.eq.s32.totalorder %s22, 1
      %p56 = por %p54, %p55
      %p57 = scmp.ne.s32.totalorder %s48, %s49
      %p58 = scmp.eq.s32.totalorder %s22, 0
      %p59 = por %p57, %p58
      %p60 = scmp.ne.s32.totalorder %s48, %s49
      %p61 = scmp.eq.s32.totalorder %s23, 1
      %p62 = por %p60, %p61
      %p64 = scmp.ne.s32.totalorder %s49, %s63
      %p65 = scmp.eq.s32.totalorder %s23, 0
      %p66 = por %p64, %p65
      %s67 = ssub.s32 %s17, %s24
      %p68 = scmp.eq.s32.totalorder %s67, 0
      %s70 = sadd.s32 %s69, 1
      %s71 = scalar_select %p68, %s69, %s70
      %p74 = pneg %p68
      %p75 = scmp.eq.s32.totalorder %s17, 1
      %p76 = por %p74, %p75
      %p77 = scmp.ne.s32.totalorder %s69, %s72
      %p78 = scmp.eq.s32.totalorder %s17, 0
      %p79 = por %p77, %p78
      %p80 = scmp.ne.s32.totalorder %s69, %s72
      %p81 = scmp.eq.s32.totalorder %s22, 1
      %p82 = por %p80, %p81
      %p83 = scmp.ne.s32.totalorder %s72, %s73
      %p84 = scmp.eq.s32.totalorder %s22, 0
      %p85 = por %p83, %p84
      %p86 = scmp.ne.s32.totalorder %s72, %s73
      %p87 = scmp.eq.s32.totalorder %s23, 1
      %p88 = por %p86, %p87
      %p90 = scmp.ne.s32.totalorder %s73, %s89
      %p91 = scmp.eq.s32.totalorder %s23, 0
      %p92 = por %p90, %p91
      %s93 = ssub.s32 %s17, %s24
      %p94 = scmp.eq.s32.totalorder %s93, 0
      %s96 = sadd.s32 %s95, 1
      %s97 = scalar_select %p94, %s95, %s96
      %p100 = pneg %p94
      %p101 = scmp.eq.s32.totalorder %s17, 1
      %p102 = por %p100, %p101
      %p103 = scmp.ne.s32.totalorder %s95, %s98
      %p104 = scmp.eq.s32.totalorder %s17, 0
      %p105 = por %p103, %p104
      %p106 = scmp.ne.s32.totalorder %s95, %s98
      %p107 = scmp.eq.s32.totalorder %s22, 1
      %p108 = por %p106, %p107
      %p109 = scmp.ne.s32.totalorder %s98, %s99
      %p110 = scmp.eq.s32.totalorder %s22, 0
      %p111 = por %p109, %p110
      %p112 = scmp.ne.s32.totalorder %s98, %s99
      %p113 = scmp.eq.s32.totalorder %s23, 1
      %p114 = por %p112, %p113
      %p116 = scmp.ne.s32.totalorder %s99, %s115
      %p117 = scmp.eq.s32.totalorder %s23, 0
      %p118 = por %p116, %p117
      %p119 = scmp.le.s32.totalorder 1, %s17
      %p120 = scmp.lt.s32.totalorder %s17, 3
      %p121 = pnand %p119, %p120
      %p122 = pneg %p121
      // Predicated region
      $region9: #{tpu_custom_call.1} parent=5 // pred_check
        _
      $region10: #{tpu_custom_call.1} parent=5 // pred_check_branch
        %124 = sbr.rel (%p121) target = $region12
      $region11: #{tpu_custom_call.1} parent=5 // pred_region
        %s125 = ssub.s32 %s17, 1
        // Predicated region
        $region13: #{tpu_custom_call.1} parent=11 // pred_check
          %p126 = pneg %p38
        $region14: #{tpu_custom_call.1} parent=11 // pred_check_branch
          %128 = sbr.rel (%p126) target = $region16
        $region15: #{tpu_custom_call.1} parent=11 // pred_region
          %130 = vsyncadd [#allocation7], 0
          %s132 = sshll.u32 %s0, 4
          %s133 = int_to_ptr.hbm [resolvable:$true] %s132
          %135 = dma.hbm_to_smem %s133, 16, [#allocation4], [#allocation7]
        $region16: #{tpu_custom_call.1} parent=11 // pred_fallthru
          _
        // Predicated region
        $region17: #{tpu_custom_call.1} parent=11 // pred_check
          %p136 = pneg %p59
        $region18: #{tpu_custom_call.1} parent=11 // pred_check_branch
          %138 = sbr.rel (%p136) target = $region20
        $region19: #{tpu_custom_call.1} parent=11 // pred_region
          %140 = vsyncadd [#allocation9], 0
          %s142 = sshll.u32 %s1, 4
          %s143 = int_to_ptr.hbm [resolvable:$true] %s142
          %145 = dma.hbm_to_smem %s143, 16, [#allocation8], [#allocation9]
        $region20: #{tpu_custom_call.1} parent=11 // pred_fallthru
          _
      $region12: #{tpu_custom_call.1} parent=5 // pred_fallthru
        _
      %p146 = scmp.lt.s32.totalorder %s17, 2
      // Predicated region
      $region21: #{tpu_custom_call.1} parent=5 // pred_check
        %p147 = pneg %p146
      $region22: #{tpu_custom_call.1} parent=5 // pred_check_branch
        %149 = sbr.rel (%p147) target = $region24
      $region23: #{tpu_custom_call.1} parent=5 // pred_region
        // Predicated region
        $region25: #{tpu_custom_call.1} parent=23 // pred_check
          %p150 = pneg %p79
        $region26: #{tpu_custom_call.1} parent=23 // pred_check_branch
          %152 = sbr.rel (%p150) target = $region28
        $region27: #{tpu_custom_call.1} parent=23 // pred_region
          %s153 = sand.u32 %s69, 1
          %s154 = scalar_lea.sflag [#allocation5], %s153
          %s155 = sand.u32 %s69, 1
          %s156 = smul.addr %s155, 64
          %s157 = scalar_lea.vmem [#allocation10], %s156
          %s158 = smul.u32 4, %s17
          %160 = vsyncadd %s154, 0
          %s161 = smul.addr %s158, 2
          %s162 = smul.addr %s161, 8
          %s163 = scalar_lea.hbm %s2, %s162
          %s164 = sshll.u32 %s163, 4
          %s165 = int_to_ptr.hbm [resolvable:$true] %s164
          %s166 = sshll.u32 %s157, 4
          %s167 = int_to_ptr.vmem [resolvable:$true] %s166
          %172 = dma.hbm_to_vmem [thread:$0]  %s165, 1024, %s167, %s154, 128, 128, 8
        $region28: #{tpu_custom_call.1} parent=23 // pred_fallthru
          _
      $region24: #{tpu_custom_call.1} parent=5 // pred_fallthru
        _
      %p173 = scmp.le.s32.totalorder 1, %s17
      %p174 = scmp.lt.s32.totalorder %s17, 3
      %p175 = pnand %p173, %p174
      %p176 = pneg %p175
      // Predicated region
      $region29: #{tpu_custom_call.1} parent=5 // pred_check
        _
      $region30: #{tpu_custom_call.1} parent=5 // pred_check_branch
        %178 = sbr.rel (%p175) target = $region32
      $region31: #{tpu_custom_call.1} parent=5 // pred_region
        %s179 = ssub.s32 %s17, 1
        // Predicated region
        $region33: #{tpu_custom_call.1} parent=31 // pred_check
          %p180 = pneg %p38
        $region34: #{tpu_custom_call.1} parent=31 // pred_check_branch
          %182 = sbr.rel (%p180) target = $region36
        $region35: #{tpu_custom_call.1} parent=31 // pred_region
          %184 = dma.done [#allocation7], 16
        $region36: #{tpu_custom_call.1} parent=31 // pred_fallthru
          _
        // Predicated region
        $region37: #{tpu_custom_call.1} parent=31 // pred_check
          %p185 = pneg %p59
        $region38: #{tpu_custom_call.1} parent=31 // pred_check_branch
          %187 = sbr.rel (%p185) target = $region40
        $region39: #{tpu_custom_call.1} parent=31 // pred_region
          %189 = dma.done [#allocation9], 16
        $region40: #{tpu_custom_call.1} parent=31 // pred_fallthru
          _
        %s190 = sand.u32 %s72, 1
        %s191 = scalar_lea.sflag [#allocation5], %s190
        %s192 = sand.u32 %s72, 1
        %s193 = smul.addr %s192, 64
        %s194 = scalar_lea.vmem [#allocation10], %s193
        // Predicated region
        $region41: #{tpu_custom_call.1} parent=31 // pred_check
          %p195 = pneg %p85
        $region42: #{tpu_custom_call.1} parent=31 // pred_check_branch
          %197 = sbr.rel (%p195) target = $region44
        $region43: #{tpu_custom_call.1} parent=31 // pred_region
          %199 = dma.done %s191, 1024
        $region44: #{tpu_custom_call.1} parent=31 // pred_fallthru
          _
        %200 = sfence
        %p201 = pneg %p38
        %p202 = pneg %p35
        %p203 = pneg %p59
        %p204 = pneg %p56
        %s205 = sand.u32 %s72, 1
        %s206 = scalar_lea.sflag [#allocation5], %s205
        %s207 = sand.u32 %s72, 1
        %s208 = smul.addr %s207, 64
        %s209 = scalar_lea.vmem [#allocation10], %s208
        %p210 = pneg %p85
        %p211 = pneg %p82
        %p212 = pneg %p111
        %p213 = pneg %p108
        %s214 = sand.u32 %s98, 1
        %s215 = scalar_lea.sflag [#allocation6], %s214
        %s216 = sand.u32 %s98, 1
        %s217 = smul.addr %s216, 64
        %s218 = scalar_lea.vmem [#allocation11], %s217
        %s219 = smul.u32 4, %s22
        %s220 = smul.u32 4, %s22
        %v221 = vld [vmem:[%s194] sm:$0xff]
        %v222 = vld [vmem:[%s194 + $0x8] sm:$0xff]
        %v223 = vld [vmem:[%s194 + $0x10] sm:$0xff]
        %v224 = vld [vmem:[%s194 + $0x18] sm:$0xff]
        %v225 = vld [vmem:[%s194 + $0x20] sm:$0xff]
        %v226 = vld [vmem:[%s194 + $0x28] sm:$0xff]
        %v227 = vld [vmem:[%s194 + $0x30] sm:$0xff]
        %v228 = vld [vmem:[%s194 + $0x38] sm:$0xff]
        %237 = vrot.lane.b32.xlu0 %v221, 2
        %v238 = vpop.permute.xlu0 %237
        %239 = vrot.lane.b32.xlu0 %v222, 2
        %v240 = vpop.permute.xlu0 %239
        %241 = vrot.lane.b32.xlu0 %v223, 2
        %v242 = vpop.permute.xlu0 %241
        %243 = vrot.lane.b32.xlu0 %v224, 2
        %v244 = vpop.permute.xlu0 %243
        %245 = vrot.lane.b32.xlu0 %v225, 2
        %v246 = vpop.permute.xlu0 %245
        %247 = vrot.lane.b32.xlu0 %v226, 2
        %v248 = vpop.permute.xlu0 %247
        %249 = vrot.lane.b32.xlu0 %v227, 2
        %v250 = vpop.permute.xlu0 %249
        %251 = vrot.lane.b32.xlu0 %v228, 2
        %v252 = vpop.permute.xlu0 %251
        %vm261 = vcmask 146448
        %262 = vst.msk [vmem:[#allocation2 + $0x2] sm:$0xff] %vm261, %v238
        %263 = vst.msk [vmem:[#allocation2 + $0xa] sm:$0xff] %vm261, %v240
        %264 = vst.msk [vmem:[#allocation2 + $0x1a] sm:$0xff] %vm261, %v242
        %265 = vst.msk [vmem:[#allocation2 + $0x22] sm:$0xff] %vm261, %v244
        %266 = vst.msk [vmem:[#allocation2 + $0x32] sm:$0xff] %vm261, %v246
        %267 = vst.msk [vmem:[#allocation2 + $0x3a] sm:$0xff] %vm261, %v248
        %268 = vst.msk [vmem:[#allocation2 + $0x4a] sm:$0xff] %vm261, %v250
        %269 = vst.msk [vmem:[#allocation2 + $0x52] sm:$0xff] %vm261, %v252
        %v270 = vld [vmem:[%s194] sm:$0xff]
        %v271 = vld [vmem:[%s194 + $0x8] sm:$0xff]
        %v272 = vld [vmem:[%s194 + $0x10] sm:$0xff]
        %v273 = vld [vmem:[%s194 + $0x18] sm:$0xff]
        %v274 = vld [vmem:[%s194 + $0x20] sm:$0xff]
        %v275 = vld [vmem:[%s194 + $0x28] sm:$0xff]
        %v276 = vld [vmem:[%s194 + $0x30] sm:$0xff]
        %v277 = vld [vmem:[%s194 + $0x38] sm:$0xff]
        %vm278 = vcmask 15368
        %279 = vst.msk [vmem:[#allocation2 + $0x2] sm:$0xff] %vm278, %v270
        %280 = vst.msk [vmem:[#allocation2 + $0xa] sm:$0xff] %vm278, %v271
        %281 = vst.msk [vmem:[#allocation2 + $0x1a] sm:$0xff] %vm278, %v272
        %282 = vst.msk [vmem:[#allocation2 + $0x22] sm:$0xff] %vm278, %v273
        %283 = vst.msk [vmem:[#allocation2 + $0x32] sm:$0xff] %vm278, %v274
        %284 = vst.msk [vmem:[#allocation2 + $0x3a] sm:$0xff] %vm278, %v275
        %285 = vst.msk [vmem:[#allocation2 + $0x4a] sm:$0xff] %vm278, %v276
        %286 = vst.msk [vmem:[#allocation2 + $0x52] sm:$0xff] %vm278, %v277
        %v287 = vld [vmem:[%s194] sm:$0xff]
        %v288 = vld [vmem:[%s194 + $0x8] sm:$0xff]
        %v289 = vld [vmem:[%s194 + $0x10] sm:$0xff]
        %v290 = vld [vmem:[%s194 + $0x18] sm:$0xff]
        %v291 = vld [vmem:[%s194 + $0x20] sm:$0xff]
        %v292 = vld [vmem:[%s194 + $0x28] sm:$0xff]
        %v293 = vld [vmem:[%s194 + $0x30] sm:$0xff]
        %v294 = vld [vmem:[%s194 + $0x38] sm:$0xff]
        %303 = vrot.lane.b32.xlu0 %v287, 4
        %v304 = vpop.permute.xlu0 %303
        %305 = vrot.lane.b32.xlu0 %v288, 4
        %v306 = vpop.permute.xlu0 %305
        %307 = vrot.lane.b32.xlu0 %v289, 4
        %v308 = vpop.permute.xlu0 %307
        %309 = vrot.lane.b32.xlu0 %v290, 4
        %v310 = vpop.permute.xlu0 %309
        %311 = vrot.lane.b32.xlu0 %v291, 4
        %v312 = vpop.permute.xlu0 %311
        %313 = vrot.lane.b32.xlu0 %v292, 4
        %v314 = vpop.permute.xlu0 %313
        %315 = vrot.lane.b32.xlu0 %v293, 4
        %v316 = vpop.permute.xlu0 %315
        %317 = vrot.lane.b32.xlu0 %v294, 4
        %v318 = vpop.permute.xlu0 %317
        %vm327 = vcmask 154768
        %328 = vst.msk [vmem:[#allocation2 + $0x2] sm:$0xff] %vm327, %v304
        %329 = vst.msk [vmem:[#allocation2 + $0xa] sm:$0xff] %vm327, %v306
        %330 = vst.msk [vmem:[#allocation2 + $0x1a] sm:$0xff] %vm327, %v308
        %331 = vst.msk [vmem:[#allocation2 + $0x22] sm:$0xff] %vm327, %v310
        %332 = vst.msk [vmem:[#allocation2 + $0x32] sm:$0xff] %vm327, %v312
        %333 = vst.msk [vmem:[#allocation2 + $0x3a] sm:$0xff] %vm327, %v314
        %334 = vst.msk [vmem:[#allocation2 + $0x4a] sm:$0xff] %vm327, %v316
        %335 = vst.msk [vmem:[#allocation2 + $0x52] sm:$0xff] %vm327, %v318
        %v336 = vld [vmem:[%s194] sm:$0xff]
        %v337 = vld [vmem:[%s194 + $0x8] sm:$0xff]
        %v338 = vld [vmem:[%s194 + $0x10] sm:$0xff]
        %v339 = vld [vmem:[%s194 + $0x18] sm:$0xff]
        %v340 = vld [vmem:[%s194 + $0x20] sm:$0xff]
        %v341 = vld [vmem:[%s194 + $0x28] sm:$0xff]
        %v342 = vld [vmem:[%s194 + $0x30] sm:$0xff]
        %v343 = vld [vmem:[%s194 + $0x38] sm:$0xff]
        %352 = vrot.lane.b32.xlu0 %v336, 126
        %v353 = vpop.permute.xlu0 %352
        %354 = vrot.lane.b32.xlu0 %v337, 126
        %v355 = vpop.permute.xlu0 %354
        %356 = vrot.lane.b32.xlu0 %v338, 126
        %v357 = vpop.permute.xlu0 %356
        %358 = vrot.lane.b32.xlu0 %v339, 126
        %v359 = vpop.permute.xlu0 %358
        %360 = vrot.lane.b32.xlu0 %v340, 126
        %v361 = vpop.permute.xlu0 %360
        %362 = vrot.lane.b32.xlu0 %v341, 126
        %v363 = vpop.permute.xlu0 %362
        %364 = vrot.lane.b32.xlu0 %v342, 126
        %v365 = vpop.permute.xlu0 %364
        %366 = vrot.lane.b32.xlu0 %v343, 126
        %v367 = vpop.permute.xlu0 %366
        %vm376 = vcmask 7168
        %377 = vst.msk [vmem:[#allocation2 + $0x2] sm:$0xff] %vm376, %v353
        %378 = vst.msk [vmem:[#allocation2 + $0xa] sm:$0xff] %vm376, %v355
        %379 = vst.msk [vmem:[#allocation2 + $0x1a] sm:$0xff] %vm376, %v357
        %380 = vst.msk [vmem:[#allocation2 + $0x22] sm:$0xff] %vm376, %v359
        %381 = vst.msk [vmem:[#allocation2 + $0x32] sm:$0xff] %vm376, %v361
        %382 = vst.msk [vmem:[#allocation2 + $0x3a] sm:$0xff] %vm376, %v363
        %383 = vst.msk [vmem:[#allocation2 + $0x4a] sm:$0xff] %vm376, %v365
        %384 = vst.msk [vmem:[#allocation2 + $0x52] sm:$0xff] %vm376, %v367
        %v385 = vld [vmem:[%s194] sm:$0xff]
        %v386 = vld [vmem:[%s194 + $0x8] sm:$0xff]
        %v387 = vld [vmem:[%s194 + $0x10] sm:$0xff]
        %v388 = vld [vmem:[%s194 + $0x18] sm:$0xff]
        %v389 = vld [vmem:[%s194 + $0x20] sm:$0xff]
        %v390 = vld [vmem:[%s194 + $0x28] sm:$0xff]
        %v391 = vld [vmem:[%s194 + $0x30] sm:$0xff]
        %v392 = vld [vmem:[%s194 + $0x38] sm:$0xff]
        %401 = vrot.lane.b32.xlu0 %v385, 6
        %v402 = vpop.permute.xlu0 %401
        %403 = vrot.lane.b32.xlu0 %v386, 6
        %v404 = vpop.permute.xlu0 %403
        %405 = vrot.lane.b32.xlu0 %v387, 6
        %v406 = vpop.permute.xlu0 %405
        %407 = vrot.lane.b32.xlu0 %v388, 6
        %v408 = vpop.permute.xlu0 %407
        %409 = vrot.lane.b32.xlu0 %v389, 6
        %v410 = vpop.permute.xlu0 %409
        %411 = vrot.lane.b32.xlu0 %v390, 6
        %v412 = vpop.permute.xlu0 %411
        %413 = vrot.lane.b32.xlu0 %v391, 6
        %v414 = vpop.permute.xlu0 %413
        %415 = vrot.lane.b32.xlu0 %v392, 6
        %v416 = vpop.permute.xlu0 %415
        %vm425 = vcmask 162968
        %426 = vst.msk [vmem:[#allocation2 + $0x2] sm:$0xff] %vm425, %v402
        %427 = vst.msk [vmem:[#allocation2 + $0xa] sm:$0xff] %vm425, %v404
        %428 = vst.msk [vmem:[#allocation2 + $0x1a] sm:$0xff] %vm425, %v406
        %429 = vst.msk [vmem:[#allocation2 + $0x22] sm:$0xff] %vm425, %v408
        %430 = vst.msk [vmem:[#allocation2 + $0x32] sm:$0xff] %vm425, %v410
        %431 = vst.msk [vmem:[#allocation2 + $0x3a] sm:$0xff] %vm425, %v412
        %432 = vst.msk [vmem:[#allocation2 + $0x4a] sm:$0xff] %vm425, %v414
        %433 = vst.msk [vmem:[#allocation2 + $0x52] sm:$0xff] %vm425, %v416
        %v434 = vld [vmem:[#allocation2 + $0x3] sm:$0x1]
        %v435 = vld [vmem:[#allocation2 + $0x1b] sm:$0x1]
        %v436 = vld [vmem:[#allocation2 + $0x33] sm:$0x1]
        %v437 = vld [vmem:[#allocation2 + $0x4b] sm:$0x1]
        %vm438 = vcmask 155648
        %439 = vst.msk [vmem:[#allocation2 + $0x1] sm:$0x1] %vm438, %v434
        %440 = vst.msk [vmem:[#allocation2 + $0x19] sm:$0x1] %vm438, %v435
        %441 = vst.msk [vmem:[#allocation2 + $0x31] sm:$0x1] %vm438, %v436
        %442 = vst.msk [vmem:[#allocation2 + $0x49] sm:$0x1] %vm438, %v437
        %v443 = vld [vmem:[#allocation2 + $0x10] sm:$0x1]
        %v444 = vld [vmem:[#allocation2 + $0x28] sm:$0x1]
        %v445 = vld [vmem:[#allocation2 + $0x40] sm:$0x1]
        %v446 = vld [vmem:[#allocation2 + $0x58] sm:$0x1]
        %447 = vst.msk [vmem:[#allocation2 + $0x12] sm:$0x1] %vm438, %v443
        %448 = vst.msk [vmem:[#allocation2 + $0x2a] sm:$0x1] %vm438, %v444
        %449 = vst.msk [vmem:[#allocation2 + $0x42] sm:$0x1] %vm438, %v445
        %450 = vst.msk [vmem:[#allocation2 + $0x5a] sm:$0x1] %vm438, %v446
        %v451 = vld [vmem:[#allocation2 + $0x4] sm:$0x1]
        %v452 = vld [vmem:[#allocation2 + $0x1c] sm:$0x1]
        %v453 = vld [vmem:[#allocation2 + $0x34] sm:$0x1]
        %v454 = vld [vmem:[#allocation2 + $0x4c] sm:$0x1]
        %455 = vst.msk [vmem:[#allocation2] sm:$0x1] %vm438, %v451
        %456 = vst.msk [vmem:[#allocation2 + $0x18] sm:$0x1] %vm438, %v452
        %457 = vst.msk [vmem:[#allocation2 + $0x30] sm:$0x1] %vm438, %v453
        %458 = vst.msk [vmem:[#allocation2 + $0x48] sm:$0x1] %vm438, %v454
        %v459 = vld [vmem:[#allocation2 + $0xf] sm:$0x1]
        %v460 = vld [vmem:[#allocation2 + $0x27] sm:$0x1]
        %v461 = vld [vmem:[#allocation2 + $0x3f] sm:$0x1]
        %v462 = vld [vmem:[#allocation2 + $0x57] sm:$0x1]
        %463 = vst.msk [vmem:[#allocation2 + $0x13] sm:$0x1] %vm438, %v459
        %464 = vst.msk [vmem:[#allocation2 + $0x2b] sm:$0x1] %vm438, %v460
        %465 = vst.msk [vmem:[#allocation2 + $0x43] sm:$0x1] %vm438, %v461
        %466 = vst.msk [vmem:[#allocation2 + $0x5b] sm:$0x1] %vm438, %v462
        %s467 = sld [smem:[#allocation8]]
        %v468 = vld [vmem:[#allocation2] sm:$0xff]
        %v469 = vld [vmem:[#allocation2 + $0x8] sm:$0xff]
        %v470 = vld [vmem:[#allocation2 + $0x10] sm:$0xf]
        %v471 = vld [vmem:[#allocation2 + $0x18] sm:$0xff]
        %v472 = vld [vmem:[#allocation2 + $0x20] sm:$0xff]
        %v473 = vld [vmem:[#allocation2 + $0x28] sm:$0xf]
        %v474 = vld [vmem:[#allocation2 + $0x30] sm:$0xff]
        %v475 = vld [vmem:[#allocation2 + $0x38] sm:$0xff]
        %v476 = vld [vmem:[#allocation2 + $0x40] sm:$0xf]
        %v477 = vld [vmem:[#allocation2 + $0x48] sm:$0xff]
        %v478 = vld [vmem:[#allocation2 + $0x50] sm:$0xff]
        %v479 = vld [vmem:[#allocation2 + $0x58] sm:$0xf]
        %v480 = vstv %s467
        %v481 = vmul.f32 %v480, %v468
        %v482 = vmul.f32 %v480, %v469
        %v483 = vmul.f32 %v480, %v470
        %v484 = vmul.f32 %v480, %v471
        %v485 = vmul.f32 %v480, %v472
        %v486 = vmul.f32 %v480, %v473
        %v487 = vmul.f32 %v480, %v474
        %v488 = vmul.f32 %v480, %v475
        %v489 = vmul.f32 %v480, %v476
        %v490 = vmul.f32 %v480, %v477
        %v491 = vmul.f32 %v480, %v478
        %v492 = vmul.f32 %v480, %v479
        %s493 = sld [smem:[#allocation8 + $0x1]]
        %v494 = vstv %s493
        %v495 = vmul.f32 %v494, %v468
        %v496 = vmul.f32 %v494, %v469
        %v497 = vmul.f32 %v494, %v470
        %v498 = vmul.f32 %v494, %v471
        %v499 = vmul.f32 %v494, %v472
        %v500 = vmul.f32 %v494, %v473
        %v501 = vmul.f32 %v494, %v474
        %v502 = vmul.f32 %v494, %v475
        %v503 = vmul.f32 %v494, %v476
        %v504 = vmul.f32 %v494, %v477
        %v505 = vmul.f32 %v494, %v478
        %v506 = vmul.f32 %v494, %v479
        %519 = vrot.lane.b32.xlu0 %v495, 127
        %v520 = vpop.permute.xlu0 %519
        %521 = vrot.lane.b32.xlu0 %v496, 127
        %v522 = vpop.permute.xlu0 %521
        %523 = vrot.lane.b32.xlu0 %v497, 127
        %v524 = vpop.permute.xlu0 %523
        %525 = vrot.lane.b32.xlu0 %v498, 127
        %v526 = vpop.permute.xlu0 %525
        %527 = vrot.lane.b32.xlu0 %v499, 127
        %v528 = vpop.permute.xlu0 %527
        %529 = vrot.lane.b32.xlu0 %v500, 127
        %v530 = vpop.permute.xlu0 %529
        %531 = vrot.lane.b32.xlu0 %v501, 127
        %v532 = vpop.permute.xlu0 %531
        %533 = vrot.lane.b32.xlu0 %v502, 127
        %v534 = vpop.permute.xlu0 %533
        %535 = vrot.lane.b32.xlu0 %v503, 127
        %v536 = vpop.permute.xlu0 %535
        %537 = vrot.lane.b32.xlu0 %v504, 127
        %v538 = vpop.permute.xlu0 %537
        %539 = vrot.lane.b32.xlu0 %v505, 127
        %v540 = vpop.permute.xlu0 %539
        %541 = vrot.lane.b32.xlu0 %v506, 127
        %v542 = vpop.permute.xlu0 %541
        %v555 = vadd.f32 %v481, %v520
        %v556 = vadd.f32 %v482, %v522
        %v557 = vadd.f32 %v483, %v524
        %v558 = vadd.f32 %v484, %v526
        %v559 = vadd.f32 %v485, %v528
        %v560 = vadd.f32 %v486, %v530
        %v561 = vadd.f32 %v487, %v532
        %v562 = vadd.f32 %v488, %v534
        %v563 = vadd.f32 %v489, %v536
        %v564 = vadd.f32 %v490, %v538
        %v565 = vadd.f32 %v491, %v540
        %v566 = vadd.f32 %v492, %v542
        %s567 = sld [smem:[#allocation8 + $0x2]]
        %v568 = vstv %s567
        %v569 = vmul.f32 %v568, %v468
        %v570 = vmul.f32 %v568, %v469
        %v571 = vmul.f32 %v568, %v470
        %v572 = vmul.f32 %v568, %v471
        %v573 = vmul.f32 %v568, %v472
        %v574 = vmul.f32 %v568, %v473
        %v575 = vmul.f32 %v568, %v474
        %v576 = vmul.f32 %v568, %v475
        %v577 = vmul.f32 %v568, %v476
        %v578 = vmul.f32 %v568, %v477
        %v579 = vmul.f32 %v568, %v478
        %v580 = vmul.f32 %v568, %v479
        %593 = vrot.lane.b32.xlu0 %v569, 126
        %v594 = vpop.permute.xlu0 %593
        %595 = vrot.lane.b32.xlu0 %v570, 126
        %v596 = vpop.permute.xlu0 %595
        %597 = vrot.lane.b32.xlu0 %v571, 126
        %v598 = vpop.permute.xlu0 %597
        %599 = vrot.lane.b32.xlu0 %v572, 126
        %v600 = vpop.permute.xlu0 %599
        %601 = vrot.lane.b32.xlu0 %v573, 126
        %v602 = vpop.permute.xlu0 %601
        %603 = vrot.lane.b32.xlu0 %v574, 126
        %v604 = vpop.permute.xlu0 %603
        %605 = vrot.lane.b32.xlu0 %v575, 126
        %v606 = vpop.permute.xlu0 %605
        %607 = vrot.lane.b32.xlu0 %v576, 126
        %v608 = vpop.permute.xlu0 %607
        %609 = vrot.lane.b32.xlu0 %v577, 126
        %v610 = vpop.permute.xlu0 %609
        %611 = vrot.lane.b32.xlu0 %v578, 126
        %v612 = vpop.permute.xlu0 %611
        %613 = vrot.lane.b32.xlu0 %v579, 126
        %v614 = vpop.permute.xlu0 %613
        %615 = vrot.lane.b32.xlu0 %v580, 126
        %v616 = vpop.permute.xlu0 %615
        %v629 = vadd.f32 %v555, %v594
        %v630 = vadd.f32 %v556, %v596
        %v631 = vadd.f32 %v557, %v598
        %v632 = vadd.f32 %v558, %v600
        %v633 = vadd.f32 %v559, %v602
        %v634 = vadd.f32 %v560, %v604
        %v635 = vadd.f32 %v561, %v606
        %v636 = vadd.f32 %v562, %v608
        %v637 = vadd.f32 %v563, %v610
        %v638 = vadd.f32 %v564, %v612
        %v639 = vadd.f32 %v565, %v614
        %v640 = vadd.f32 %v566, %v616
        %s641 = sld [smem:[#allocation8 + $0x3]]
        %v642 = vstv %s641
        %v643 = vmul.f32 %v642, %v468
        %v644 = vmul.f32 %v642, %v469
        %v645 = vmul.f32 %v642, %v470
        %v646 = vmul.f32 %v642, %v471
        %v647 = vmul.f32 %v642, %v472
        %v648 = vmul.f32 %v642, %v473
        %v649 = vmul.f32 %v642, %v474
        %v650 = vmul.f32 %v642, %v475
        %v651 = vmul.f32 %v642, %v476
        %v652 = vmul.f32 %v642, %v477
        %v653 = vmul.f32 %v642, %v478
        %v654 = vmul.f32 %v642, %v479
        %667 = vrot.lane.b32.xlu0 %v643, 125
        %v668 = vpop.permute.xlu0 %667
        %669 = vrot.lane.b32.xlu0 %v644, 125
        %v670 = vpop.permute.xlu0 %669
        %671 = vrot.lane.b32.xlu0 %v645, 125
        %v672 = vpop.permute.xlu0 %671
        %673 = vrot.lane.b32.xlu0 %v646, 125
        %v674 = vpop.permute.xlu0 %673
        %675 = vrot.lane.b32.xlu0 %v647, 125
        %v676 = vpop.permute.xlu0 %675
        %677 = vrot.lane.b32.xlu0 %v648, 125
        %v678 = vpop.permute.xlu0 %677
        %679 = vrot.lane.b32.xlu0 %v649, 125
        %v680 = vpop.permute.xlu0 %679
        %681 = vrot.lane.b32.xlu0 %v650, 125
        %v682 = vpop.permute.xlu0 %681
        %683 = vrot.lane.b32.xlu0 %v651, 125
        %v684 = vpop.permute.xlu0 %683
        %685 = vrot.lane.b32.xlu0 %v652, 125
        %v686 = vpop.permute.xlu0 %685
        %687 = vrot.lane.b32.xlu0 %v653, 125
        %v688 = vpop.permute.xlu0 %687
        %689 = vrot.lane.b32.xlu0 %v654, 125
        %v690 = vpop.permute.xlu0 %689
        %v703 = vadd.f32 %v629, %v668
        %v704 = vadd.f32 %v630, %v670
        %v705 = vadd.f32 %v631, %v672
        %v706 = vadd.f32 %v632, %v674
        %v707 = vadd.f32 %v633, %v676
        %v708 = vadd.f32 %v634, %v678
        %v709 = vadd.f32 %v635, %v680
        %v710 = vadd.f32 %v636, %v682
        %v711 = vadd.f32 %v637, %v684
        %v712 = vadd.f32 %v638, %v686
        %v713 = vadd.f32 %v639, %v688
        %v714 = vadd.f32 %v640, %v690
        %s715 = sld [smem:[#allocation8 + $0x4]]
        %v716 = vstv %s715
        %v717 = vmul.f32 %v716, %v468
        %v718 = vmul.f32 %v716, %v469
        %v719 = vmul.f32 %v716, %v470
        %v720 = vmul.f32 %v716, %v471
        %v721 = vmul.f32 %v716, %v472
        %v722 = vmul.f32 %v716, %v473
        %v723 = vmul.f32 %v716, %v474
        %v724 = vmul.f32 %v716, %v475
        %v725 = vmul.f32 %v716, %v476
        %v726 = vmul.f32 %v716, %v477
        %v727 = vmul.f32 %v716, %v478
        %v728 = vmul.f32 %v716, %v479
        %741 = vrot.lane.b32.xlu0 %v717, 124
        %v742 = vpop.permute.xlu0 %741
        %743 = vrot.lane.b32.xlu0 %v718, 124
        %v744 = vpop.permute.xlu0 %743
        %745 = vrot.lane.b32.xlu0 %v719, 124
        %v746 = vpop.permute.xlu0 %745
        %747 = vrot.lane.b32.xlu0 %v720, 124
        %v748 = vpop.permute.xlu0 %747
        %749 = vrot.lane.b32.xlu0 %v721, 124
        %v750 = vpop.permute.xlu0 %749
        %751 = vrot.lane.b32.xlu0 %v722, 124
        %v752 = vpop.permute.xlu0 %751
        %753 = vrot.lane.b32.xlu0 %v723, 124
        %v754 = vpop.permute.xlu0 %753
        %755 = vrot.lane.b32.xlu0 %v724, 124
        %v756 = vpop.permute.xlu0 %755
        %757 = vrot.lane.b32.xlu0 %v725, 124
        %v758 = vpop.permute.xlu0 %757
        %759 = vrot.lane.b32.xlu0 %v726, 124
        %v760 = vpop.permute.xlu0 %759
        %761 = vrot.lane.b32.xlu0 %v727, 124
        %v762 = vpop.permute.xlu0 %761
        %763 = vrot.lane.b32.xlu0 %v728, 124
        %v764 = vpop.permute.xlu0 %763
        %v777 = vadd.f32 %v703, %v742
        %v778 = vadd.f32 %v704, %v744
        %v779 = vadd.f32 %v705, %v746
        %v780 = vadd.f32 %v706, %v748
        %v781 = vadd.f32 %v707, %v750
        %v782 = vadd.f32 %v708, %v752
        %v783 = vadd.f32 %v709, %v754
        %v784 = vadd.f32 %v710, %v756
        %v785 = vadd.f32 %v711, %v758
        %v786 = vadd.f32 %v712, %v760
        %v787 = vadd.f32 %v713, %v762
        %v788 = vadd.f32 %v714, %v764
        %vm789 = vcmask 130048
        %790 = vst.msk [vmem:[#allocation3] sm:$0xff] %vm789, %v777
        %791 = vst.msk [vmem:[#allocation3 + $0x8] sm:$0xff] %vm789, %v778
        %vm792 = vcmask 125952
        %793 = vst.msk [vmem:[#allocation3 + $0x10] sm:$0xf] %vm792, %v779
        %794 = vst.msk [vmem:[#allocation3 + $0x18] sm:$0xff] %vm789, %v780
        %795 = vst.msk [vmem:[#allocation3 + $0x20] sm:$0xff] %vm789, %v781
        %796 = vst.msk [vmem:[#allocation3 + $0x28] sm:$0xf] %vm792, %v782
        %797 = vst.msk [vmem:[#allocation3 + $0x30] sm:$0xff] %vm789, %v783
        %798 = vst.msk [vmem:[#allocation3 + $0x38] sm:$0xff] %vm789, %v784
        %799 = vst.msk [vmem:[#allocation3 + $0x40] sm:$0xf] %vm792, %v785
        %800 = vst.msk [vmem:[#allocation3 + $0x48] sm:$0xff] %vm789, %v786
        %801 = vst.msk [vmem:[#allocation3 + $0x50] sm:$0xff] %vm789, %v787
        %802 = vst.msk [vmem:[#allocation3 + $0x58] sm:$0xf] %vm792, %v788
        %s803 = sld [smem:[#allocation4]]
        %v804 = vld [vmem:[#allocation3] sm:$0xff]
        %v805 = vld [vmem:[#allocation3 + $0x8] sm:$0xff]
        %v806 = vld [vmem:[#allocation3 + $0x18] sm:$0xff]
        %v807 = vld [vmem:[#allocation3 + $0x20] sm:$0xff]
        %v808 = vld [vmem:[#allocation3 + $0x30] sm:$0xff]
        %v809 = vld [vmem:[#allocation3 + $0x38] sm:$0xff]
        %v810 = vld [vmem:[#allocation3 + $0x48] sm:$0xff]
        %v811 = vld [vmem:[#allocation3 + $0x50] sm:$0xff]
        %v812 = vstv %s803
        %v813 = vmul.f32 %v812, %v804
        %v814 = vmul.f32 %v812, %v805
        %v815 = vmul.f32 %v812, %v806
        %v816 = vmul.f32 %v812, %v807
        %v817 = vmul.f32 %v812, %v808
        %v818 = vmul.f32 %v812, %v809
        %v819 = vmul.f32 %v812, %v810
        %v820 = vmul.f32 %v812, %v811
        %s821 = sld [smem:[#allocation4 + $0x1]]
        %v822 = vld [vmem:[#allocation3 + $0x1] sm:$0xff]
        %v823 = vld [vmem:[#allocation3 + $0x9] sm:$0xff]
        %v824 = vld [vmem:[#allocation3 + $0x19] sm:$0xff]
        %v825 = vld [vmem:[#allocation3 + $0x21] sm:$0xff]
        %v826 = vld [vmem:[#allocation3 + $0x31] sm:$0xff]
        %v827 = vld [vmem:[#allocation3 + $0x39] sm:$0xff]
        %v828 = vld [vmem:[#allocation3 + $0x49] sm:$0xff]
        %v829 = vld [vmem:[#allocation3 + $0x51] sm:$0xff]
        %v830 = vstv %s821
        %v831 = vmul.f32 %v830, %v822
        %v832 = vmul.f32 %v830, %v823
        %v833 = vmul.f32 %v830, %v824
        %v834 = vmul.f32 %v830, %v825
        %v835 = vmul.f32 %v830, %v826
        %v836 = vmul.f32 %v830, %v827
        %v837 = vmul.f32 %v830, %v828
        %v838 = vmul.f32 %v830, %v829
        %v839 = vadd.f32 %v813, %v831
        %v840 = vadd.f32 %v814, %v832
        %v841 = vadd.f32 %v815, %v833
        %v842 = vadd.f32 %v816, %v834
        %v843 = vadd.f32 %v817, %v835
        %v844 = vadd.f32 %v818, %v836
        %v845 = vadd.f32 %v819, %v837
        %v846 = vadd.f32 %v820, %v838
        %s847 = sld [smem:[#allocation4 + $0x2]]
        %v848 = vld [vmem:[#allocation3 + $0x2] sm:$0xff]
        %v849 = vld [vmem:[#allocation3 + $0xa] sm:$0xff]
        %v850 = vld [vmem:[#allocation3 + $0x1a] sm:$0xff]
        %v851 = vld [vmem:[#allocation3 + $0x22] sm:$0xff]
        %v852 = vld [vmem:[#allocation3 + $0x32] sm:$0xff]
        %v853 = vld [vmem:[#allocation3 + $0x3a] sm:$0xff]
        %v854 = vld [vmem:[#allocation3 + $0x4a] sm:$0xff]
        %v855 = vld [vmem:[#allocation3 + $0x52] sm:$0xff]
        %v856 = vstv %s847
        %v857 = vmul.f32 %v856, %v848
        %v858 = vmul.f32 %v856, %v849
        %v859 = vmul.f32 %v856, %v850
        %v860 = vmul.f32 %v856, %v851
        %v861 = vmul.f32 %v856, %v852
        %v862 = vmul.f32 %v856, %v853
        %v863 = vmul.f32 %v856, %v854
        %v864 = vmul.f32 %v856, %v855
        %v865 = vadd.f32 %v839, %v857
        %v866 = vadd.f32 %v840, %v858
        %v867 = vadd.f32 %v841, %v859
        %v868 = vadd.f32 %v842, %v860
        %v869 = vadd.f32 %v843, %v861
        %v870 = vadd.f32 %v844, %v862
        %v871 = vadd.f32 %v845, %v863
        %v872 = vadd.f32 %v846, %v864
        %s873 = sld [smem:[#allocation4 + $0x3]]
        %v874 = vld [vmem:[#allocation3 + $0x3] sm:$0xff]
        %v875 = vld [vmem:[#allocation3 + $0xb] sm:$0xff]
        %v876 = vld [vmem:[#allocation3 + $0x1b] sm:$0xff]
        %v877 = vld [vmem:[#allocation3 + $0x23] sm:$0xff]
        %v878 = vld [vmem:[#allocation3 + $0x33] sm:$0xff]
        %v879 = vld [vmem:[#allocation3 + $0x3b] sm:$0xff]
        %v880 = vld [vmem:[#allocation3 + $0x4b] sm:$0xff]
        %v881 = vld [vmem:[#allocation3 + $0x53] sm:$0xff]
        %v882 = vstv %s873
        %v883 = vmul.f32 %v882, %v874
        %v884 = vmul.f32 %v882, %v875
        %v885 = vmul.f32 %v882, %v876
        %v886 = vmul.f32 %v882, %v877
        %v887 = vmul.f32 %v882, %v878
        %v888 = vmul.f32 %v882, %v879
        %v889 = vmul.f32 %v882, %v880
        %v890 = vmul.f32 %v882, %v881
        %v891 = vadd.f32 %v865, %v883
        %v892 = vadd.f32 %v866, %v884
        %v893 = vadd.f32 %v867, %v885
        %v894 = vadd.f32 %v868, %v886
        %v895 = vadd.f32 %v869, %v887
        %v896 = vadd.f32 %v870, %v888
        %v897 = vadd.f32 %v871, %v889
        %v898 = vadd.f32 %v872, %v890
        %s899 = sld [smem:[#allocation4 + $0x4]]
        %v900 = vld [vmem:[#allocation3 + $0x4] sm:$0xff]
        %v901 = vld [vmem:[#allocation3 + $0xc] sm:$0xff]
        %v902 = vld [vmem:[#allocation3 + $0x1c] sm:$0xff]
        %v903 = vld [vmem:[#allocation3 + $0x24] sm:$0xff]
        %v904 = vld [vmem:[#allocation3 + $0x34] sm:$0xff]
        %v905 = vld [vmem:[#allocation3 + $0x3c] sm:$0xff]
        %v906 = vld [vmem:[#allocation3 + $0x4c] sm:$0xff]
        %v907 = vld [vmem:[#allocation3 + $0x54] sm:$0xff]
        %v908 = vstv %s899
        %v909 = vmul.f32 %v908, %v900
        %v910 = vmul.f32 %v908, %v901
        %v911 = vmul.f32 %v908, %v902
        %v912 = vmul.f32 %v908, %v903
        %v913 = vmul.f32 %v908, %v904
        %v914 = vmul.f32 %v908, %v905
        %v915 = vmul.f32 %v908, %v906
        %v916 = vmul.f32 %v908, %v907
        %v917 = vadd.f32 %v891, %v909
        %v918 = vadd.f32 %v892, %v910
        %v919 = vadd.f32 %v893, %v911
        %v920 = vadd.f32 %v894, %v912
        %v921 = vadd.f32 %v895, %v913
        %v922 = vadd.f32 %v896, %v914
        %v923 = vadd.f32 %v897, %v915
        %v924 = vadd.f32 %v898, %v916
        %925 = vst.msk [vmem:[%s218] sm:$0xff] %vm789, %v917
        %926 = vst.msk [vmem:[%s218 + $0x8] sm:$0xff] %vm789, %v918
        %927 = vst.msk [vmem:[%s218 + $0x10] sm:$0xff] %vm789, %v919
        %928 = vst.msk [vmem:[%s218 + $0x18] sm:$0xff] %vm789, %v920
        %929 = vst.msk [vmem:[%s218 + $0x20] sm:$0xff] %vm789, %v921
        %930 = vst.msk [vmem:[%s218 + $0x28] sm:$0xff] %vm789, %v922
        %931 = vst.msk [vmem:[%s218 + $0x30] sm:$0xff] %vm789, %v923
        %932 = vst.msk [vmem:[%s218 + $0x38] sm:$0xff] %vm789, %v924
        %s933 = sand.u32 %s98, 1
        %s934 = scalar_lea.sflag [#allocation6], %s933
        %s935 = sand.u32 %s98, 1
        %s936 = smul.addr %s935, 64
        %s937 = scalar_lea.vmem [#allocation11], %s936
        // Predicated region
        $region45: #{tpu_custom_call.1} parent=31 // pred_check
          %p938 = pneg %p108
        $region46: #{tpu_custom_call.1} parent=31 // pred_check_branch
          %940 = sbr.rel (%p938) target = $region48
        $region47: #{tpu_custom_call.1} parent=31 // pred_region
          %s941 = smul.u32 4, %s22
          %943 = vsyncadd %s934, 0
          %s944 = smul.addr %s941, 2
          %s945 = smul.addr %s944, 8
          %s946 = scalar_lea.hbm %s3, %s945
          %s947 = sshll.u32 %s937, 4
          %s948 = int_to_ptr.vmem [resolvable:$true] %s947
          %s949 = sshll.u32 %s946, 4
          %s950 = int_to_ptr.hbm [resolvable:$true] %s949
          %955 = dma.vmem_to_hbm [thread:$0]  %s948, 1024, %s950, %s934, 128, 128, 8
        $region48: #{tpu_custom_call.1} parent=31 // pred_fallthru
          _
      $region32: #{tpu_custom_call.1} parent=5 // pred_fallthru
        _
      %p956 = scmp.le.s32.totalorder 2, %s17
      // Predicated region
      $region49: #{tpu_custom_call.1} parent=5 // pred_check
        %p957 = pneg %p956
      $region50: #{tpu_custom_call.1} parent=5 // pred_check_branch
        %959 = sbr.rel (%p957) target = $region52
      $region51: #{tpu_custom_call.1} parent=5 // pred_region
        %s960 = ssub.s32 %s17, 2
        // Predicated region
        $region53: #{tpu_custom_call.1} parent=51 // pred_check
          %p961 = pneg %p114
        $region54: #{tpu_custom_call.1} parent=51 // pred_check_branch
          %963 = sbr.rel (%p961) target = $region56
        $region55: #{tpu_custom_call.1} parent=51 // pred_region
          %s964 = sand.u32 %s99, 1
          %s965 = scalar_lea.sflag [#allocation6], %s964
          %s966 = sand.u32 %s99, 1
          %s967 = smul.addr %s966, 64
          %s968 = scalar_lea.vmem [#allocation11], %s967
          %970 = dma.done %s965, 1024
        $region56: #{tpu_custom_call.1} parent=51 // pred_fallthru
          _
      $region52: #{tpu_custom_call.1} parent=5 // pred_fallthru
        _
    $region6: #{tpu_custom_call.1} parent=1 // loop_footer
      %s21 = sadd.s32 1, %s17
    $region7: #{tpu_custom_call.1} parent=1 // loop_footer_branch
      %16 = sbr.rel target = $region3
    $region8: #{tpu_custom_call.1} parent=1 // loop_exit
      _
    %971 = vsyncpa [#allocation5], 1
    %s972 = scalar_lea.sflag [#allocation5], 1
    %973 = vsyncpa %s972, 1
    %974 = vsyncpa [#allocation6], 1
    %s975 = scalar_lea.sflag [#allocation6], 1
    %976 = vsyncpa %s975, 1
    %977 = vsyncpa [#allocation7], 1
    %s978 = scalar_lea.sflag [#allocation7], 1
    %979 = vsyncpa %s978, 1
    %980 = vsyncpa [#allocation9], 1

</llo_original>
